<compile_context>
chip_gen: v7x
topology: tpu7x:2x2x1
jax: 0.10.0
libtpu: 0.0.40
codegen_flags: <defaults>
</compile_context>

<pallas_src>
import functools

import jax
import jax.numpy as jnp
from jax.experimental import pallas as pl
from jax.experimental.pallas import tpu as pltpu


# ----------------------------- pass 1: pooling ------------------------------


def _pool_kernel(x_ref, sum_ref, max_ref, *, hw_total, hw_tile):
    """x_ref: (1, C, HW_TILE). sum_ref / max_ref: (1, 1, C) f32, resident over HW axis."""
    h = pl.program_id(1)

    @pl.when(h == 0)
    def _init():
        sum_ref[...] = jnp.zeros_like(sum_ref)
        max_ref[...] = jnp.full_like(max_ref, -jnp.inf)

    x = x_ref[...].astype(jnp.float32)  # per-tile cast only (reduction precision)
    lane = jax.lax.broadcasted_iota(jnp.int32, x.shape, 2)
    valid = (h * hw_tile + lane) < hw_total  # mask padded lanes of the tail tile

    psum = jnp.sum(jnp.where(valid, x, 0.0), axis=-1)        # (1, C)
    pmax = jnp.max(jnp.where(valid, x, -jnp.inf), axis=-1)   # (1, C)

    sum_ref[...] += psum[:, None, :]
    max_ref[...] = jnp.maximum(max_ref[...], pmax[:, None, :])

    @pl.when(h == pl.num_programs(1) - 1)
    def _finalize():
        sum_ref[...] = sum_ref[...] * (1.0 / hw_total)  # mean over the TRUE HW


# --------------------------- pass 2: apply scale ----------------------------


def _scale_kernel(x_ref, scale_ref, out_ref):
    """x_ref/out_ref: (1, C, HW_TILE) native dtype. scale_ref: (1, C, 1) f32."""
    x = x_ref[...]                            # keep native dtype (no f32 copy)
    s = scale_ref[...].astype(x.dtype)        # cast scale once per tile
    out_ref[...] = x * s


# --------------------------------- wrapper ----------------------------------


def _choose_hw_tile(hw, c, itemsize, target_bytes=2 * 1024 * 1024):
    """Lane-dense tile: full HW if small, else a multiple of 128 sized ~target_bytes."""
    max_lanes = max(128, (target_bytes // (c * itemsize)) // 128 * 128)
    if hw <= max_lanes:
        return int(hw)          # full-extent last dim is always legal
    return int(max_lanes)       # multiple of 128; tail tile masked in-kernel


def channel_gate(x_nchw, w1, b1, w2, b2):
    """x_nchw: (B, C, H, W). Weights: w1 (C, Ch), b1 (Ch,), w2 (Ch, C), b2 (C,)."""
    B, C, H, W = x_nchw.shape
    HW = H * W
    x = x_nchw.reshape(B, C, HW)

    T = _choose_hw_tile(HW, C, x.dtype.itemsize)
    n_hw = pl.cdiv(HW, T)

    # ---- pass 1: tiled avg/max pooling over HW ----
    avg_pool, max_pool = pl.pallas_call(
        functools.partial(_pool_kernel, hw_total=HW, hw_tile=T),
        grid=(B, n_hw),
        in_specs=[pl.BlockSpec((1, C, T), lambda b, h: (b, 0, h))],
        out_specs=[
            pl.BlockSpec((1, 1, C), lambda b, h: (b, 0, 0)),
            pl.BlockSpec((1, 1, C), lambda b, h: (b, 0, 0)),
        ],
        out_shape=[
            jax.ShapeDtypeStruct((B, 1, C), jnp.float32),
            jax.ShapeDtypeStruct((B, 1, C), jnp.float32),
        ],
        compiler_params=pltpu.CompilerParams(
            dimension_semantics=("parallel", "arbitrary")),
    )(x)
    avg_pool = avg_pool.reshape(B, C)
    max_pool = max_pool.reshape(B, C)

    # ---- tiny fused MLP + sigmoid (negligible FLOPs; stays in the wrapper) ----
    # TODO(synk): MLP runs as plain XLA ops, not a Pallas kernel (a few KFLOPs only).
    pooled = jnp.concatenate([avg_pool, max_pool], axis=0)            # (2B, C)
    hidden = jnp.maximum(pooled @ w1 + b1, 0.0)                       # (2B, Ch)
    att = hidden @ w2 + b2                                            # (2B, C)
    channel_att_sum = att[:B] + att[B:]                               # (B, C)
    scale = jax.nn.sigmoid(channel_att_sum).reshape(B, C, 1)          # (B, C, 1) f32

    # ---- pass 2: tiled elementwise x * scale ----
    out = pl.pallas_call(
        _scale_kernel,
        grid=(B, n_hw),
        in_specs=[
            pl.BlockSpec((1, C, T), lambda b, h: (b, 0, h)),
            pl.BlockSpec((1, C, 1), lambda b, h: (b, 0, 0)),
        ],
        out_specs=pl.BlockSpec((1, C, T), lambda b, h: (b, 0, h)),
        out_shape=jax.ShapeDtypeStruct((B, C, HW), x.dtype),
        compiler_params=pltpu.CompilerParams(
            dimension_semantics=("parallel", "parallel")),
    )(x, scale)

    return out.reshape(B, C, H, W)


# -------------------------------- reference ---------------------------------


def channel_gate_reference(x_nchw, w1, b1, w2, b2):
    B, C, H, W = x_nchw.shape
    xf = x_nchw.reshape(B, C, -1).astype(jnp.float32)
    avg_pool = jnp.mean(xf, axis=-1)
    max_pool = jnp.max(xf, axis=-1)

    def mlp(p):
        h = jnp.maximum(p @ w1 + b1, 0.0)
        return h @ w2 + b2

    att = mlp(avg_pool) + mlp(max_pool)
    scale = jax.nn.sigmoid(att)
    return (x_nchw.astype(jnp.float32) * scale[:, :, None, None]).astype(x_nchw.dtype)


if __name__ == "__main__":
    # Small, module-consistent shapes: gate_channels must be >= reduction_ratio.
    B, C, H, W = 2, 32, 16, 16
    reduction_ratio = 16
    Ch = C // reduction_ratio  # hidden = 2

    key = jax.random.PRNGKey(0)
    kx, k1, k2, k3, k4 = jax.random.split(key, 5)

    x = jax.random.normal(kx, (B, C, H, W), dtype=jnp.float32)

    # Deterministic parameter init (uniform, like nn.Linear's default range).
    bound1 = 1.0 / (C ** 0.5)
    bound2 = 1.0 / (Ch ** 0.5)
    w1 = jax.random.uniform(k1, (C, Ch), jnp.float32, -bound1, bound1)
    b1 = jax.random.uniform(k2, (Ch,), jnp.float32, -bound1, bound1)
    w2 = jax.random.uniform(k3, (Ch, C), jnp.float32, -bound2, bound2)
    b2 = jax.random.uniform(k4, (C,), jnp.float32, -bound2, bound2)

    out = channel_gate(x, w1, b1, w2, b2)
    out = jax.block_until_ready(out)

    ref = channel_gate_reference(x, w1, b1, w2, b2)
    assert out.shape == (B, C, H, W)
    assert jnp.allclose(out, ref, rtol=1e-4, atol=1e-5), "mismatch vs reference"

    print("KERNEL_OK")
</pallas_src>

<mosaic_0001>
module attributes {stable_mosaic.version = 11 : i64} {
  func.func @_pool_kernel(%arg0: i32, %arg1: i32, %arg2: memref<1x32x256xf32, #tpu.memory_space<vmem>>, %arg3: memref<1x1x32xf32, #tpu.memory_space<vmem>>, %arg4: memref<1x1x32xf32, #tpu.memory_space<vmem>>) attributes {dimension_semantics = [#tpu.dimension_semantics<parallel>, #tpu.dimension_semantics<arbitrary>], iteration_bounds = array<i64: 2, 1>, scalar_prefetch = 0 : i64, scratch_operands = 0 : i64, tpu.core_type = #tpu.core_type<tc>, window_params = [{transform_indices = @transform_0, window_bounds = array<i64: 1, 32, 256>}, {transform_indices = @transform_1, window_bounds = array<i64: 1, 1, 32>}, {transform_indices = @transform_2, window_bounds = array<i64: 1, 1, 32>}]} {
    %c0_i32 = arith.constant 0 : i32
    %0 = arith.cmpi eq, %arg1, %c0_i32 : i32
    %1 = arith.extui %0 : i1 to i32
    %c0_i32_0 = arith.constant 0 : i32
    %2 = arith.cmpi ne, %1, %c0_i32_0 : i32
    scf.if %2 {
      %cst_21 = arith.constant 0.000000e+00 : f32
      %27 = vector.broadcast %cst_21 : f32 to vector<1x1x32xf32>
      %c0_22 = arith.constant 0 : index
      %c0_23 = arith.constant 0 : index
      %c0_24 = arith.constant 0 : index
      %28 = vector.load %arg3[%c0_22, %c0_23, %c0_24] : memref<1x1x32xf32, #tpu.memory_space<vmem>>, vector<1x1x32xf32>
      tpu.vector_store %arg3[%c0_22, %c0_23, %c0_24], %27 {strides = array<i32>} : memref<1x1x32xf32, #tpu.memory_space<vmem>>, vector<1x1x32xf32>,
      %cst_25 = arith.constant 0xFF800000 : f32
      %29 = vector.broadcast %cst_25 : f32 to vector<1x1x32xf32>
      %c0_26 = arith.constant 0 : index
      %c0_27 = arith.constant 0 : index
      %c0_28 = arith.constant 0 : index
      %30 = vector.load %arg4[%c0_26, %c0_27, %c0_28] : memref<1x1x32xf32, #tpu.memory_space<vmem>>, vector<1x1x32xf32>
      tpu.vector_store %arg4[%c0_26, %c0_27, %c0_28], %29 {strides = array<i32>} : memref<1x1x32xf32, #tpu.memory_space<vmem>>, vector<1x1x32xf32>,
    } else {
    }
    %c0 = arith.constant 0 : index
    %c0_1 = arith.constant 0 : index
    %c0_2 = arith.constant 0 : index
    %3 = vector.load %arg2[%c0, %c0_1, %c0_2] : memref<1x32x256xf32, #tpu.memory_space<vmem>>, vector<1x32x256xf32>
    %4 = tpu.iota {dimensions = array<i32: 2>} : vector<1x32x256xi32>
    %c256_i32 = arith.constant 256 : i32
    %5 = arith.muli %arg1, %c256_i32 : i32
    %6 = vector.broadcast %5 : i32 to vector<1x32x256xi32>
    %7 = arith.addi %6, %4 : vector<1x32x256xi32>
    %c256_i32_3 = arith.constant 256 : i32
    %8 = vector.broadcast %c256_i32_3 : i32 to vector<1x32x256xi32>
    %9 = arith.cmpi slt, %7, %8 : vector<1x32x256xi32>
    %cst = arith.constant 0.000000e+00 : f32
    %10 = vector.broadcast %cst : f32 to vector<1x32x256xf32>
    %11 = arith.select %9, %3, %10 : vector<1x32x256xi1>, vector<1x32x256xf32>
    %cst_4 = arith.constant dense<0.000000e+00> : vector<1x32xf32>
    %12 = vector.multi_reduction <add>, %11, %cst_4 [2] : vector<1x32x256xf32> to vector<1x32xf32>
    %cst_5 = arith.constant 0xFF800000 : f32
    %13 = vector.broadcast %cst_5 : f32 to vector<1x32x256xf32>
    %14 = arith.select %9, %3, %13 : vector<1x32x256xi1>, vector<1x32x256xf32>
    %cst_6 = arith.constant dense<0xFF800000> : vector<1x32xf32>
    %15 = vector.multi_reduction <maximumf>, %14, %cst_6 [2] : vector<1x32x256xf32> to vector<1x32xf32>
    %c0_7 = arith.constant 0 : index
    %c0_8 = arith.constant 0 : index
    %c0_9 = arith.constant 0 : index
    %16 = vector.load %arg3[%c0_7, %c0_8, %c0_9] : memref<1x1x32xf32, #tpu.memory_space<vmem>>, vector<1x1x32xf32>
    %17 = vector.shape_cast %12 : vector<1x32xf32> to vector<1x1x32xf32>
    %18 = arith.addf %16, %17 : vector<1x1x32xf32>
    %c0_10 = arith.constant 0 : index
    %c0_11 = arith.constant 0 : index
    %c0_12 = arith.constant 0 : index
    %19 = vector.load %arg3[%c0_10, %c0_11, %c0_12] : memref<1x1x32xf32, #tpu.memory_space<vmem>>, vector<1x1x32xf32>
    tpu.vector_store %arg3[%c0_10, %c0_11, %c0_12], %18 {strides = array<i32>} : memref<1x1x32xf32, #tpu.memory_space<vmem>>, vector<1x1x32xf32>,
    %c0_13 = arith.constant 0 : index
    %c0_14 = arith.constant 0 : index
    %c0_15 = arith.constant 0 : index
    %20 = vector.load %arg4[%c0_13, %c0_14, %c0_15] : memref<1x1x32xf32, #tpu.memory_space<vmem>>, vector<1x1x32xf32>
    %21 = vector.shape_cast %15 : vector<1x32xf32> to vector<1x1x32xf32>
    %22 = arith.maximumf %20, %21 : vector<1x1x32xf32>
    %c0_16 = arith.constant 0 : index
    %c0_17 = arith.constant 0 : index
    %c0_18 = arith.constant 0 : index
    %23 = vector.load %arg4[%c0_16, %c0_17, %c0_18] : memref<1x1x32xf32, #tpu.memory_space<vmem>>, vector<1x1x32xf32>
    tpu.vector_store %arg4[%c0_16, %c0_17, %c0_18], %22 {strides = array<i32>} : memref<1x1x32xf32, #tpu.memory_space<vmem>>, vector<1x1x32xf32>,
    %c0_i32_19 = arith.constant 0 : i32
    %24 = arith.cmpi eq, %arg1, %c0_i32_19 : i32
    %25 = arith.extui %24 : i1 to i32
    %c0_i32_20 = arith.constant 0 : i32
    %26 = arith.cmpi ne, %25, %c0_i32_20 : i32
    scf.if %26 {
      %c0_21 = arith.constant 0 : index
      %c0_22 = arith.constant 0 : index
      %c0_23 = arith.constant 0 : index
      %27 = vector.load %arg3[%c0_21, %c0_22, %c0_23] : memref<1x1x32xf32, #tpu.memory_space<vmem>>, vector<1x1x32xf32>
      %cst_24 = arith.constant 3.906250e-03 : f32
      %28 = vector.broadcast %cst_24 : f32 to vector<1x1x32xf32>
      %29 = arith.mulf %27, %28 : vector<1x1x32xf32>
      %c0_25 = arith.constant 0 : index
      %c0_26 = arith.constant 0 : index
      %c0_27 = arith.constant 0 : index
      %30 = vector.load %arg3[%c0_25, %c0_26, %c0_27] : memref<1x1x32xf32, #tpu.memory_space<vmem>>, vector<1x1x32xf32>
      tpu.vector_store %arg3[%c0_25, %c0_26, %c0_27], %29 {strides = array<i32>} : memref<1x1x32xf32, #tpu.memory_space<vmem>>, vector<1x1x32xf32>,
    } else {
    }
    return
  }
  func.func @transform_0(%arg0: i32, %arg1: i32) -> (i32, i32, i32) {
    %c0_i32 = arith.constant 0 : i32
    %c0_i32_0 = arith.constant 0 : i32
    return %arg0, %c0_i32, %arg1 : i32, i32, i32
  }
  func.func @transform_1(%arg0: i32, %arg1: i32) -> (i32, i32, i32) {
    %c0_i32 = arith.constant 0 : i32
    %c0_i32_0 = arith.constant 0 : i32
    %c0_i32_1 = arith.constant 0 : i32
    return %arg0, %c0_i32, %c0_i32_0 : i32, i32, i32
  }
  func.func @transform_2(%arg0: i32, %arg1: i32) -> (i32, i32, i32) {
    %c0_i32 = arith.constant 0 : i32
    %c0_i32_0 = arith.constant 0 : i32
    %c0_i32_1 = arith.constant 0 : i32
    return %arg0, %c0_i32, %c0_i32_0 : i32, i32, i32
  }
}

</mosaic_0001>

<llo_original>
// kernel: tpu_custom_call.1
$region0: #{tpu_custom_call.1}
  #allocation0 [shape = 'u32[]', space=smem, size = 0x4, offset = 0x4, fixed_abs, tag = 'smem constant byte address 0x4 - core index']
  #allocation1 [shape = 'u32[144,128]{1,0:T(1,128)}', space=vmem, size = 0x12000, scoped, tag = 'internal scratch']
  %s0 = inlined_call_operand.hbm [shape: f32[2,32,256], index: 0, kind: input, shape index: {}]
  %s1 = inlined_call_operand.hbm [shape: f32[2,1,32], index: 1, kind: output, shape index: {0}]
  %s2 = inlined_call_operand.hbm [shape: f32[2,1,32], index: 2, kind: output, shape index: {1}]
  %3 = xla_tuple %s1, %s2
  %s4 = sld [smem:[#allocation0]]
  $region57: #{tpu_custom_call.1} parent=0
    _
  %s6 = ssub.s32 1, %s4
  %s7 = scalar_select 0, %s6, %s4
  $region1: #{tpu_custom_call.1} parent=0
    #allocation2 [shape = 'u8[65536]{0}', space=vmem, size = 0x10000, scoped, tag = 'input window, operand 0']
    #allocation3 [shape = 's32[2]{0}', space=sflag, size = 0x8, scoped, tag = 'scoped memory for tpu_custom_call.1']
    #allocation4 [shape = 's32[2]{0}', space=sflag, size = 0x8, scoped, tag = 'scoped memory for tpu_custom_call.1']
    #allocation5 [shape = 'u8[1024]{0}', space=vmem, size = 0x400, scoped, tag = 'output window, operand 0']
    #allocation6 [shape = 'u8[1024]{0}', space=vmem, size = 0x400, scoped, tag = 'output window, operand 1']
    #allocation7 [shape = 's32[2]{0}', space=sflag, size = 0x8, scoped, tag = 'scoped memory for tpu_custom_call.1']
    %8 = vsyncpa [#allocation3], 0
    %s9 = scalar_lea.sflag [#allocation3], 1
    %10 = vsyncpa %s9, 0
    %11 = vsyncpa [#allocation4], 0
    %s12 = scalar_lea.sflag [#allocation4], 1
    %13 = vsyncpa %s12, 0
    %14 = vsyncpa [#allocation7], 0
    %s15 = scalar_lea.sflag [#allocation7], 1
    %16 = vsyncpa %s15, 0
    loop: start=0, step=1, limit=4
    $region2: #{tpu_custom_call.1} parent=1 // loop_pre_header
      _
    $region3: #{tpu_custom_call.1} parent=1 // loop_header
      %s18 = sphi 0, %s22
      %p19 = scmp.ge.s32.totalorder %s18, 4
      %s25 = sphi 0, %s37
      %s26 = sphi 0, %s33
      %s27 = sphi 0, %s25
      %s28 = sphi 0, %s26
      %s29 = sphi 0, %s27
      %s30 = sphi 0, %s28
      %s42 = sphi 0, %s44
      %s45 = sphi 0, %s42
      %s46 = sphi 0, %s45
      %s62 = sphi 0, %s46
      %s68 = sphi 0, %s70
      %s71 = sphi 0, %s68
      %s72 = sphi 0, %s71
      %s88 = sphi 0, %s72
      %s94 = sphi 0, %s96
      %s97 = sphi 0, %s94
      %s98 = sphi 0, %s97
      %s114 = sphi 0, %s98
    $region4: #{tpu_custom_call.1} parent=1 // loop_header_branch
      %21 = sbr.rel (%p19) target = $region8
    $region5: #{tpu_custom_call.1} parent=1 // loop_body
      %s23 = ssub.s32 %s18, 1
      %s24 = ssub.s32 %s18, 2
      %s31 = sadd.s32 1, %s26
      %p32 = scmp.ge.s32.totalorder %s31, 1
      %s33 = scalar_select %p32, 0, %s31
      %s34 = sadd.s32 1, %s25
      %s35 = scalar_select %p32, %s34, %s25
      %p36 = scmp.ge.s32.totalorder %s35, 2
      %s37 = scalar_select %p36, 0, %s35
      %s38 = ssub.s32 %s25, %s37
      %s39 = ssub.s32 %s26, %s33
      %s40 = sor.u32 %s38, %s39
      %p41 = scmp.eq.s32.totalorder %s40, 0
      %s43 = sadd.s32 %s42, 1
      %s44 = scalar_select %p41, %s42, %s43
      %p47 = pneg %p41
      %p48 = scmp.eq.s32.totalorder %s18, 1
      %p49 = por %p47, %p48
      %p50 = scmp.ne.s32.totalorder %s42, %s45
      %p51 = scmp.eq.s32.totalorder %s18, 0
      %p52 = por %p50, %p51
      %p53 = scmp.ne.s32.totalorder %s42, %s45
      %p54 = scmp.eq.s32.totalorder %s23, 1
      %p55 = por %p53, %p54
      %p56 = scmp.ne.s32.totalorder %s45, %s46
      %p57 = scmp.eq.s32.totalorder %s23, 0
      %p58 = por %p56, %p57
      %p59 = scmp.ne.s32.totalorder %s45, %s46
      %p60 = scmp.eq.s32.totalorder %s24, 1
      %p61 = por %p59, %p60
      %p63 = scmp.ne.s32.totalorder %s46, %s62
      %p64 = scmp.eq.s32.totalorder %s24, 0
      %p65 = por %p63, %p64
      %s66 = ssub.s32 %s25, %s37
      %p67 = scmp.eq.s32.totalorder %s66, 0
      %s69 = sadd.s32 %s68, 1
      %s70 = scalar_select %p67, %s68, %s69
      %p73 = pneg %p67
      %p74 = scmp.eq.s32.totalorder %s18, 1
      %p75 = por %p73, %p74
      %p76 = scmp.ne.s32.totalorder %s68, %s71
      %p77 = scmp.eq.s32.totalorder %s18, 0
      %p78 = por %p76, %p77
      %p79 = scmp.ne.s32.totalorder %s68, %s71
      %p80 = scmp.eq.s32.totalorder %s23, 1
      %p81 = por %p79, %p80
      %p82 = scmp.ne.s32.totalorder %s71, %s72
      %p83 = scmp.eq.s32.totalorder %s23, 0
      %p84 = por %p82, %p83
      %p85 = scmp.ne.s32.totalorder %s71, %s72
      %p86 = scmp.eq.s32.totalorder %s24, 1
      %p87 = por %p85, %p86
      %p89 = scmp.ne.s32.totalorder %s72, %s88
      %p90 = scmp.eq.s32.totalorder %s24, 0
      %p91 = por %p89, %p90
      %s92 = ssub.s32 %s25, %s37
      %p93 = scmp.eq.s32.totalorder %s92, 0
      %s95 = sadd.s32 %s94, 1
      %s96 = scalar_select %p93, %s94, %s95
      %p99 = pneg %p93
      %p100 = scmp.eq.s32.totalorder %s18, 1
      %p101 = por %p99, %p100
      %p102 = scmp.ne.s32.totalorder %s94, %s97
      %p103 = scmp.eq.s32.totalorder %s18, 0
      %p104 = por %p102, %p103
      %p105 = scmp.ne.s32.totalorder %s94, %s97
      %p106 = scmp.eq.s32.totalorder %s23, 1
      %p107 = por %p105, %p106
      %p108 = scmp.ne.s32.totalorder %s97, %s98
      %p109 = scmp.eq.s32.totalorder %s23, 0
      %p110 = por %p108, %p109
      %p111 = scmp.ne.s32.totalorder %s97, %s98
      %p112 = scmp.eq.s32.totalorder %s24, 1
      %p113 = por %p111, %p112
      %p115 = scmp.ne.s32.totalorder %s98, %s114
      %p116 = scmp.eq.s32.totalorder %s24, 0
      %p117 = por %p115, %p116
      %p118 = scmp.le.s32.totalorder 1, %s18
      %p119 = scmp.lt.s32.totalorder %s18, 3
      %p120 = pnand %p118, %p119
      %p121 = pneg %p120
      // Predicated region
      $region9: #{tpu_custom_call.1} parent=5 // pred_check
        _
      $region10: #{tpu_custom_call.1} parent=5 // pred_check_branch
        %123 = sbr.rel (%p120) target = $region12
      $region11: #{tpu_custom_call.1} parent=5 // pred_region
        %s124 = ssub.s32 %s18, 1
      $region12: #{tpu_custom_call.1} parent=5 // pred_fallthru
        _
      %p125 = scmp.lt.s32.totalorder %s18, 2
      // Predicated region
      $region13: #{tpu_custom_call.1} parent=5 // pred_check
        %p126 = pneg %p125
      $region14: #{tpu_custom_call.1} parent=5 // pred_check_branch
        %128 = sbr.rel (%p126) target = $region16
      $region15: #{tpu_custom_call.1} parent=5 // pred_region
        // Predicated region
        $region17: #{tpu_custom_call.1} parent=15 // pred_check
          %p129 = pneg %p52
        $region18: #{tpu_custom_call.1} parent=15 // pred_check_branch
          %131 = sbr.rel (%p129) target = $region20
        $region19: #{tpu_custom_call.1} parent=15 // pred_region
          %s132 = sand.u32 %s42, 1
          %s133 = scalar_lea.sflag [#allocation3], %s132
          %s134 = sand.u32 %s42, 1
          %s135 = smul.addr %s134, 64
          %s136 = scalar_lea.vmem [#allocation2], %s135
          %s137 = smul.u32 2, %s26
          %s139 = ssub.s32 1024, 1024
          %140 = vsyncadd %s133, %s139
          %s141 = smul.addr %s25, 8
          %s142 = sadd.s32 %s137, %s141
          %s143 = smul.addr %s142, 128
          %s144 = scalar_lea.hbm %s0, %s143
          %s145 = sshll.u32 %s136, 4
          %s146 = int_to_ptr.vmem [resolvable:$true] %s145
          %151 = dma.hbm_to_vmem [thread:$0]  %s144, 1024, %s146, %s133, 256, 256, 16
        $region20: #{tpu_custom_call.1} parent=15 // pred_fallthru
          _
      $region16: #{tpu_custom_call.1} parent=5 // pred_fallthru
        _
      %p152 = scmp.le.s32.totalorder 1, %s18
      %p153 = scmp.lt.s32.totalorder %s18, 3
      %p154 = pnand %p152, %p153
      %p155 = pneg %p154
      // Predicated region
      $region21: #{tpu_custom_call.1} parent=5 // pred_check
        _
      $region22: #{tpu_custom_call.1} parent=5 // pred_check_branch
        %157 = sbr.rel (%p154) target = $region24
      $region23: #{tpu_custom_call.1} parent=5 // pred_region
        %s158 = ssub.s32 %s18, 1
        %s159 = sand.u32 %s45, 1
        %s160 = scalar_lea.sflag [#allocation3], %s159
        %s161 = sand.u32 %s45, 1
        %s162 = smul.addr %s161, 64
        %s163 = scalar_lea.vmem [#allocation2], %s162
        // Predicated region
        $region25: #{tpu_custom_call.1} parent=23 // pred_check
          %p164 = pneg %p58
        $region26: #{tpu_custom_call.1} parent=23 // pred_check_branch
          %166 = sbr.rel (%p164) target = $region28
        $region27: #{tpu_custom_call.1} parent=23 // pred_region
          %167 = dma.done %s160, 1024
        $region28: #{tpu_custom_call.1} parent=23 // pred_fallthru
          _
        %s168 = sand.u32 %s45, 1
        %s169 = scalar_lea.sflag [#allocation3], %s168
        %s170 = sand.u32 %s45, 1
        %s171 = smul.addr %s170, 64
        %s172 = scalar_lea.vmem [#allocation2], %s171
        %p173 = pneg %p58
        %p174 = pneg %p55
        %p175 = pneg %p84
        %p176 = pneg %p81
        %s177 = sand.u32 %s71, 1
        %s178 = scalar_lea.sflag [#allocation4], %s177
        %s179 = sand.u32 %s71, 1
        %s180 = scalar_lea.vmem [#allocation5], %s179
        %p181 = pneg %p110
        %p182 = pneg %p107
        %s183 = sand.u32 %s97, 1
        %s184 = scalar_lea.sflag [#allocation7], %s183
        %s185 = sand.u32 %s97, 1
        %s186 = scalar_lea.vmem [#allocation6], %s185
        %s187 = smul.u32 2, %s28
        %p188 = scmp.eq.s32.totalorder %s28, 0
        // Predicated region
        $region29: #{tpu_custom_call.1} parent=23 // pred_check
          %p189 = pneg %p188
        $region30: #{tpu_custom_call.1} parent=23 // pred_check_branch
          %191 = sbr.rel (%p189) target = $region32
        $region31: #{tpu_custom_call.1} parent=23 // pred_region
          %vm192 = vcmask 253952
          %193 = vst.msk [vmem:[%s180] sm:$0x1] %vm192, 0.0
          %194 = vst.msk [vmem:[%s186] sm:$0x1] %vm192, -inf
        $region32: #{tpu_custom_call.1} parent=23 // pred_fallthru
          _
        %v195 = vld [vmem:[%s163] sm:$0xff]
        %v196 = vld [vmem:[%s163 + $0x8] sm:$0xff]
        %v197 = vld [vmem:[%s163 + $0x10] sm:$0xff]
        %v198 = vld [vmem:[%s163 + $0x18] sm:$0xff]
        %v199 = vld [vmem:[%s163 + $0x20] sm:$0xff]
        %v200 = vld [vmem:[%s163 + $0x28] sm:$0xff]
        %v201 = vld [vmem:[%s163 + $0x30] sm:$0xff]
        %v202 = vld [vmem:[%s163 + $0x38] sm:$0xff]
        %v203 = vlaneseq
        %v204 = vand.u32 %v203, 127
        %v205 = vadd.s32 %v204, 128
        %s206 = smul.u32 %s28, 256
        %v207 = vstv %s206
        %v208 = vadd.s32 %v207, %v204
        %v209 = vadd.s32 %v207, %v205
        %vm210 = vcmp.lt.s32.totalorder %v208, 256
        %vm211 = vcmp.lt.s32.totalorder %v209, 256
        %v212 = vsel %vm210, %v195, 0.0
        %v213 = vsel %vm211, %v196, 0.0
        %v214 = vsel %vm210, %v197, 0.0
        %v215 = vsel %vm211, %v198, 0.0
        %v216 = vsel %vm210, %v199, 0.0
        %v217 = vsel %vm211, %v200, 0.0
        %v218 = vsel %vm210, %v201, 0.0
        %v219 = vsel %vm211, %v202, 0.0
        %v220 = vadd.f32 %v212, %v213
        %221 = vadd.xlane.f32.xlu0 %v220
        %v222 = vpop.xlane.xlu0 %221
        %v223 = vadd.f32 %v214, %v215
        %224 = vadd.xlane.f32.xlu0 %v223
        %v225 = vpop.xlane.xlu0 %224
        %v226 = vadd.f32 %v216, %v217
        %227 = vadd.xlane.f32.xlu0 %v226
        %v228 = vpop.xlane.xlu0 %227
        %v229 = vadd.f32 %v218, %v219
        %230 = vadd.xlane.f32.xlu0 %v229
        %v231 = vpop.xlane.xlu0 %230
        %v232 = vsel %vm210, %v195, -inf
        %v233 = vsel %vm211, %v196, -inf
        %v234 = vsel %vm210, %v197, -inf
        %v235 = vsel %vm211, %v198, -inf
        %v236 = vsel %vm210, %v199, -inf
        %v237 = vsel %vm211, %v200, -inf
        %v238 = vsel %vm210, %v201, -inf
        %v239 = vsel %vm211, %v202, -inf
        %v240 = vmax.f32 %v232, %v233
        %241 = vmax.xlane.f32.xlu0 %v240
        %v242 = vpop.xlane.xlu0 %241
        %v243 = vmax.f32 %v234, %v235
        %244 = vmax.xlane.f32.xlu0 %v243
        %v245 = vpop.xlane.xlu0 %244
        %v246 = vmax.f32 %v236, %v237
        %247 = vmax.xlane.f32.xlu0 %v246
        %v248 = vpop.xlane.xlu0 %247
        %v249 = vmax.f32 %v238, %v239
        %250 = vmax.xlane.f32.xlu0 %v249
        %v251 = vpop.xlane.xlu0 %250
        %v252 = vld [vmem:[%s180] sm:$0x1]
        %v257 = vlaneseq
        %v258 = vshrl.u32 %v257, 7
        %v259 = vsub.s32 0, %v258
        %v260 = vrot.slane %v222, %v259
        %v261 = vlaneseq
        %v262 = vshrl.u32 %v261, 7
        %v263 = vsub.s32 1, %v262
        %v264 = vrot.slane %v222, %v263
        %v265 = vlaneseq
        %v266 = vshrl.u32 %v265, 7
        %v267 = vsub.s32 2, %v266
        %v268 = vrot.slane %v222, %v267
        %v269 = vlaneseq
        %v270 = vshrl.u32 %v269, 7
        %v271 = vsub.s32 3, %v270
        %v272 = vrot.slane %v222, %v271
        %v273 = vlaneseq
        %v274 = vshrl.u32 %v273, 7
        %v275 = vsub.s32 4, %v274
        %v276 = vrot.slane %v222, %v275
        %v277 = vlaneseq
        %v278 = vshrl.u32 %v277, 7
        %v279 = vsub.s32 5, %v278
        %v280 = vrot.slane %v222, %v279
        %v281 = vlaneseq
        %v282 = vshrl.u32 %v281, 7
        %v283 = vsub.s32 6, %v282
        %v284 = vrot.slane %v222, %v283
        %v285 = vlaneseq
        %v286 = vshrl.u32 %v285, 7
        %v287 = vsub.s32 7, %v286
        %v288 = vrot.slane %v222, %v287
        %v289 = vlaneseq
        %v290 = vshrl.u32 %v289, 7
        %v291 = vsub.s32 0, %v290
        %v292 = vrot.slane %v225, %v291
        %v293 = vlaneseq
        %v294 = vshrl.u32 %v293, 7
        %v295 = vsub.s32 1, %v294
        %v296 = vrot.slane %v225, %v295
        %v297 = vlaneseq
        %v298 = vshrl.u32 %v297, 7
        %v299 = vsub.s32 2, %v298
        %v300 = vrot.slane %v225, %v299
        %v301 = vlaneseq
        %v302 = vshrl.u32 %v301, 7
        %v303 = vsub.s32 3, %v302
        %v304 = vrot.slane %v225, %v303
        %v305 = vlaneseq
        %v306 = vshrl.u32 %v305, 7
        %v307 = vsub.s32 4, %v306
        %v308 = vrot.slane %v225, %v307
        %v309 = vlaneseq
        %v310 = vshrl.u32 %v309, 7
        %v311 = vsub.s32 5, %v310
        %v312 = vrot.slane %v225, %v311
        %v313 = vlaneseq
        %v314 = vshrl.u32 %v313, 7
        %v315 = vsub.s32 6, %v314
        %v316 = vrot.slane %v225, %v315
        %v317 = vlaneseq
        %v318 = vshrl.u32 %v317, 7
        %v319 = vsub.s32 7, %v318
        %v320 = vrot.slane %v225, %v319
        %v321 = vlaneseq
        %v322 = vshrl.u32 %v321, 7
        %v323 = vsub.s32 0, %v322
        %v324 = vrot.slane %v228, %v323
        %v325 = vlaneseq
        %v326 = vshrl.u32 %v325, 7
        %v327 = vsub.s32 1, %v326
        %v328 = vrot.slane %v228, %v327
        %v329 = vlaneseq
        %v330 = vshrl.u32 %v329, 7
        %v331 = vsub.s32 2, %v330
        %v332 = vrot.slane %v228, %v331
        %v333 = vlaneseq
        %v334 = vshrl.u32 %v333, 7
        %v335 = vsub.s32 3, %v334
        %v336 = vrot.slane %v228, %v335
        %v337 = vlaneseq
        %v338 = vshrl.u32 %v337, 7
        %v339 = vsub.s32 4, %v338
        %v340 = vrot.slane %v228, %v339
        %v341 = vlaneseq
        %v342 = vshrl.u32 %v341, 7
        %v343 = vsub.s32 5, %v342
        %v344 = vrot.slane %v228, %v343
        %v345 = vlaneseq
        %v346 = vshrl.u32 %v345, 7
        %v347 = vsub.s32 6, %v346
        %v348 = vrot.slane %v228, %v347
        %v349 = vlaneseq
        %v350 = vshrl.u32 %v349, 7
        %v351 = vsub.s32 7, %v350
        %v352 = vrot.slane %v228, %v351
        %v353 = vlaneseq
        %v354 = vshrl.u32 %v353, 7
        %v355 = vsub.s32 0, %v354
        %v356 = vrot.slane %v231, %v355
        %v357 = vlaneseq
        %v358 = vshrl.u32 %v357, 7
        %v359 = vsub.s32 1, %v358
        %v360 = vrot.slane %v231, %v359
        %v361 = vlaneseq
        %v362 = vshrl.u32 %v361, 7
        %v363 = vsub.s32 2, %v362
        %v364 = vrot.slane %v231, %v363
        %v365 = vlaneseq
        %v366 = vshrl.u32 %v365, 7
        %v367 = vsub.s32 3, %v366
        %v368 = vrot.slane %v231, %v367
        %v369 = vlaneseq
        %v370 = vshrl.u32 %v369, 7
        %v371 = vsub.s32 4, %v370
        %v372 = vrot.slane %v231, %v371
        %v373 = vlaneseq
        %v374 = vshrl.u32 %v373, 7
        %v375 = vsub.s32 5, %v374
        %v376 = vrot.slane %v231, %v375
        %v377 = vlaneseq
        %v378 = vshrl.u32 %v377, 7
        %v379 = vsub.s32 6, %v378
        %v380 = vrot.slane %v231, %v379
        %v381 = vlaneseq
        %v382 = vshrl.u32 %v381, 7
        %v383 = vsub.s32 7, %v382
        %v384 = vrot.slane %v231, %v383
        %v385 = vcombine.low %v260, %v264
        %v386 = vcombine.low %v268, %v272
        %v387 = vcombine.low %v276, %v280
        %v388 = vcombine.low %v284, %v288
        %v390 = vunpack.c.l.s4 1966171168
        %v391 = vunpack.c.0.s8 %v390
        %v392 = vlaneseq
        %v393 = vshrl.u32 %v392, 7
        %v394 = vsub.s32 %v391, %v393
        %v395 = vrot.slane %v385, %v394
        %v397 = vunpack.c.l.s4 1966171168
        %v398 = vunpack.c.0.s8 %v397
        %v399 = vlaneseq
        %v400 = vshrl.u32 %v399, 7
        %v401 = vsub.s32 %v398, %v400
        %v402 = vrot.slane %v386, %v401
        %v404 = vunpack.c.l.s4 1966171168
        %v405 = vunpack.c.0.s8 %v404
        %v406 = vlaneseq
        %v407 = vshrl.u32 %v406, 7
        %v408 = vsub.s32 %v405, %v407
        %v409 = vrot.slane %v387, %v408
        %v411 = vunpack.c.l.s4 1966171168
        %v412 = vunpack.c.0.s8 %v411
        %v413 = vlaneseq
        %v414 = vshrl.u32 %v413, 7
        %v415 = vsub.s32 %v412, %v414
        %v416 = vrot.slane %v388, %v415
        %v417 = vcombine.low %v395, %v402
        %v418 = vcombine.low %v409, %v416
        %v420 = vunpack.c.l.s4 1966171168
        %v421 = vunpack.c.0.s8 %v420
        %v422 = vlaneseq
        %v423 = vshrl.u32 %v422, 7
        %v424 = vsub.s32 %v421, %v423
        %v425 = vrot.slane %v417, %v424
        %v427 = vunpack.c.l.s4 1966171168
        %v428 = vunpack.c.0.s8 %v427
        %v429 = vlaneseq
        %v430 = vshrl.u32 %v429, 7
        %v431 = vsub.s32 %v428, %v430
        %v432 = vrot.slane %v418, %v431
        %v433 = vcombine.low %v425, %v432
        %v434 = vcombine.low %v292, %v296
        %v435 = vcombine.low %v300, %v304
        %v436 = vcombine.low %v308, %v312
        %v437 = vcombine.low %v316, %v320
        %v439 = vunpack.c.l.s4 1966171168
        %v440 = vunpack.c.0.s8 %v439
        %v441 = vlaneseq
        %v442 = vshrl.u32 %v441, 7
        %v443 = vsub.s32 %v440, %v442
        %v444 = vrot.slane %v434, %v443
        %v446 = vunpack.c.l.s4 1966171168
        %v447 = vunpack.c.0.s8 %v446
        %v448 = vlaneseq
        %v449 = vshrl.u32 %v448, 7
        %v450 = vsub.s32 %v447, %v449
        %v451 = vrot.slane %v435, %v450
        %v453 = vunpack.c.l.s4 1966171168
        %v454 = vunpack.c.0.s8 %v453
        %v455 = vlaneseq
        %v456 = vshrl.u32 %v455, 7
        %v457 = vsub.s32 %v454, %v456
        %v458 = vrot.slane %v436, %v457
        %v460 = vunpack.c.l.s4 1966171168
        %v461 = vunpack.c.0.s8 %v460
        %v462 = vlaneseq
        %v463 = vshrl.u32 %v462, 7
        %v464 = vsub.s32 %v461, %v463
        %v465 = vrot.slane %v437, %v464
        %v466 = vcombine.low %v444, %v451
        %v467 = vcombine.low %v458, %v465
        %v469 = vunpack.c.l.s4 1966171168
        %v470 = vunpack.c.0.s8 %v469
        %v471 = vlaneseq
        %v472 = vshrl.u32 %v471, 7
        %v473 = vsub.s32 %v470, %v472
        %v474 = vrot.slane %v466, %v473
        %v476 = vunpack.c.l.s4 1966171168
        %v477 = vunpack.c.0.s8 %v476
        %v478 = vlaneseq
        %v479 = vshrl.u32 %v478, 7
        %v480 = vsub.s32 %v477, %v479
        %v481 = vrot.slane %v467, %v480
        %v482 = vcombine.low %v474, %v481
        %v483 = vcombine.low %v324, %v328
        %v484 = vcombine.low %v332, %v336
        %v485 = vcombine.low %v340, %v344
        %v486 = vcombine.low %v348, %v352
        %v488 = vunpack.c.l.s4 1966171168
        %v489 = vunpack.c.0.s8 %v488
        %v490 = vlaneseq
        %v491 = vshrl.u32 %v490, 7
        %v492 = vsub.s32 %v489, %v491
        %v493 = vrot.slane %v483, %v492
        %v495 = vunpack.c.l.s4 1966171168
        %v496 = vunpack.c.0.s8 %v495
        %v497 = vlaneseq
        %v498 = vshrl.u32 %v497, 7
        %v499 = vsub.s32 %v496, %v498
        %v500 = vrot.slane %v484, %v499
        %v502 = vunpack.c.l.s4 1966171168
        %v503 = vunpack.c.0.s8 %v502
        %v504 = vlaneseq
        %v505 = vshrl.u32 %v504, 7
        %v506 = vsub.s32 %v503, %v505
        %v507 = vrot.slane %v485, %v506
        %v509 = vunpack.c.l.s4 1966171168
        %v510 = vunpack.c.0.s8 %v509
        %v511 = vlaneseq
        %v512 = vshrl.u32 %v511, 7
        %v513 = vsub.s32 %v510, %v512
        %v514 = vrot.slane %v486, %v513
        %v515 = vcombine.low %v493, %v500
        %v516 = vcombine.low %v507, %v514
        %v518 = vunpack.c.l.s4 1966171168
        %v519 = vunpack.c.0.s8 %v518
        %v520 = vlaneseq
        %v521 = vshrl.u32 %v520, 7
        %v522 = vsub.s32 %v519, %v521
        %v523 = vrot.slane %v515, %v522
        %v525 = vunpack.c.l.s4 1966171168
        %v526 = vunpack.c.0.s8 %v525
        %v527 = vlaneseq
        %v528 = vshrl.u32 %v527, 7
        %v529 = vsub.s32 %v526, %v528
        %v530 = vrot.slane %v516, %v529
        %v531 = vcombine.low %v523, %v530
        %v532 = vcombine.low %v356, %v360
        %v533 = vcombine.low %v364, %v368
        %v534 = vcombine.low %v372, %v376
        %v535 = vcombine.low %v380, %v384
        %v537 = vunpack.c.l.s4 1966171168
        %v538 = vunpack.c.0.s8 %v537
        %v539 = vlaneseq
        %v540 = vshrl.u32 %v539, 7
        %v541 = vsub.s32 %v538, %v540
        %v542 = vrot.slane %v532, %v541
        %v544 = vunpack.c.l.s4 1966171168
        %v545 = vunpack.c.0.s8 %v544
        %v546 = vlaneseq
        %v547 = vshrl.u32 %v546, 7
        %v548 = vsub.s32 %v545, %v547
        %v549 = vrot.slane %v533, %v548
        %v551 = vunpack.c.l.s4 1966171168
        %v552 = vunpack.c.0.s8 %v551
        %v553 = vlaneseq
        %v554 = vshrl.u32 %v553, 7
        %v555 = vsub.s32 %v552, %v554
        %v556 = vrot.slane %v534, %v555
        %v558 = vunpack.c.l.s4 1966171168
        %v559 = vunpack.c.0.s8 %v558
        %v560 = vlaneseq
        %v561 = vshrl.u32 %v560, 7
        %v562 = vsub.s32 %v559, %v561
        %v563 = vrot.slane %v535, %v562
        %v564 = vcombine.low %v542, %v549
        %v565 = vcombine.low %v556, %v563
        %v567 = vunpack.c.l.s4 1966171168
        %v568 = vunpack.c.0.s8 %v567
        %v569 = vlaneseq
        %v570 = vshrl.u32 %v569, 7
        %v571 = vsub.s32 %v568, %v570
        %v572 = vrot.slane %v564, %v571
        %v574 = vunpack.c.l.s4 1966171168
        %v575 = vunpack.c.0.s8 %v574
        %v576 = vlaneseq
        %v577 = vshrl.u32 %v576, 7
        %v578 = vsub.s32 %v575, %v577
        %v579 = vrot.slane %v565, %v578
        %v580 = vcombine.low %v572, %v579
        %581 = vset.pattern.permute.xlu0 0
        %582 = vperm.xlu0 %581, %v433
        %v583 = vpop.permute.xlu0 %582
        %584 = vset.pattern.permute.xlu0 0
        %585 = vperm.xlu0 %584, %v482
        %v586 = vpop.permute.xlu0 %585
        %587 = vset.pattern.permute.xlu0 0
        %588 = vperm.xlu0 %587, %v531
        %v589 = vpop.permute.xlu0 %588
        %590 = vset.pattern.permute.xlu0 0
        %591 = vperm.xlu0 %590, %v580
        %v592 = vpop.permute.xlu0 %591
        %v593 = vlaneseq
        %v594 = vshrl.u32 %v593, 7
        %v595 = vsub.s32 %v204, %v594
        %v596 = vrot.slane %v583, %v595
        %v597 = vadd.s32 %v204, 4294967288
        %v598 = vlaneseq
        %v599 = vshrl.u32 %v598, 7
        %v600 = vsub.s32 %v597, %v599
        %v601 = vrot.slane %v586, %v600
        %vm602 = vcmask 130112
        %v603 = vsel %vm602, %v601, %v596
        %v604 = vadd.s32 %v204, 4294967280
        %v605 = vlaneseq
        %v606 = vshrl.u32 %v605, 7
        %v607 = vsub.s32 %v604, %v606
        %v608 = vrot.slane %v589, %v607
        %vm609 = vcmask 195712
        %v610 = vsel %vm609, %v608, %v603
        %v611 = vadd.s32 %v204, 4294967272
        %v612 = vlaneseq
        %v613 = vshrl.u32 %v612, 7
        %v614 = vsub.s32 %v611, %v613
        %v615 = vrot.slane %v592, %v614
        %vm616 = vcmask 261312
        %v617 = vsel %vm616, %v615, %v610
        %v619 = vunpack.c.l.s4 1966171168
        %v620 = vunpack.c.0.s8 %v619
        %v621 = vlaneseq
        %v622 = vshrl.u32 %v621, 7
        %v623 = vsub.s32 %v620, %v622
        %v624 = vrot.slane %v617, %v623
        %v626 = vunpack.c.l.s4 1966171168
        %v627 = vunpack.c.0.s8 %v626
        %v628 = vlaneseq
        %v629 = vshrl.u32 %v628, 7
        %v630 = vsub.s32 %v627, %v629
        %v631 = vrot.slane %v624, %v630
        %v633 = vadd.f32 %v252, %v631
        %vm634 = vcmask 253952
        %635 = vst.msk [vmem:[%s180] sm:$0x1] %vm634, %v633
        %v636 = vld [vmem:[%s186] sm:$0x1]
        %v641 = vlaneseq
        %v642 = vshrl.u32 %v641, 7
        %v643 = vsub.s32 0, %v642
        %v644 = vrot.slane %v242, %v643
        %v645 = vlaneseq
        %v646 = vshrl.u32 %v645, 7
        %v647 = vsub.s32 1, %v646
        %v648 = vrot.slane %v242, %v647
        %v649 = vlaneseq
        %v650 = vshrl.u32 %v649, 7
        %v651 = vsub.s32 2, %v650
        %v652 = vrot.slane %v242, %v651
        %v653 = vlaneseq
        %v654 = vshrl.u32 %v653, 7
        %v655 = vsub.s32 3, %v654
        %v656 = vrot.slane %v242, %v655
        %v657 = vlaneseq
        %v658 = vshrl.u32 %v657, 7
        %v659 = vsub.s32 4, %v658
        %v660 = vrot.slane %v242, %v659
        %v661 = vlaneseq
        %v662 = vshrl.u32 %v661, 7
        %v663 = vsub.s32 5, %v662
        %v664 = vrot.slane %v242, %v663
        %v665 = vlaneseq
        %v666 = vshrl.u32 %v665, 7
        %v667 = vsub.s32 6, %v666
        %v668 = vrot.slane %v242, %v667
        %v669 = vlaneseq
        %v670 = vshrl.u32 %v669, 7
        %v671 = vsub.s32 7, %v670
        %v672 = vrot.slane %v242, %v671
        %v673 = vlaneseq
        %v674 = vshrl.u32 %v673, 7
        %v675 = vsub.s32 0, %v674
        %v676 = vrot.slane %v245, %v675
        %v677 = vlaneseq
        %v678 = vshrl.u32 %v677, 7
        %v679 = vsub.s32 1, %v678
        %v680 = vrot.slane %v245, %v679
        %v681 = vlaneseq
        %v682 = vshrl.u32 %v681, 7
        %v683 = vsub.s32 2, %v682
        %v684 = vrot.slane %v245, %v683
        %v685 = vlaneseq
        %v686 = vshrl.u32 %v685, 7
        %v687 = vsub.s32 3, %v686
        %v688 = vrot.slane %v245, %v687
        %v689 = vlaneseq
        %v690 = vshrl.u32 %v689, 7
        %v691 = vsub.s32 4, %v690
        %v692 = vrot.slane %v245, %v691
        %v693 = vlaneseq
        %v694 = vshrl.u32 %v693, 7
        %v695 = vsub.s32 5, %v694
        %v696 = vrot.slane %v245, %v695
        %v697 = vlaneseq
        %v698 = vshrl.u32 %v697, 7
        %v699 = vsub.s32 6, %v698
        %v700 = vrot.slane %v245, %v699
        %v701 = vlaneseq
        %v702 = vshrl.u32 %v701, 7
        %v703 = vsub.s32 7, %v702
        %v704 = vrot.slane %v245, %v703
        %v705 = vlaneseq
        %v706 = vshrl.u32 %v705, 7
        %v707 = vsub.s32 0, %v706
        %v708 = vrot.slane %v248, %v707
        %v709 = vlaneseq
        %v710 = vshrl.u32 %v709, 7
        %v711 = vsub.s32 1, %v710
        %v712 = vrot.slane %v248, %v711
        %v713 = vlaneseq
        %v714 = vshrl.u32 %v713, 7
        %v715 = vsub.s32 2, %v714
        %v716 = vrot.slane %v248, %v715
        %v717 = vlaneseq
        %v718 = vshrl.u32 %v717, 7
        %v719 = vsub.s32 3, %v718
        %v720 = vrot.slane %v248, %v719
        %v721 = vlaneseq
        %v722 = vshrl.u32 %v721, 7
        %v723 = vsub.s32 4, %v722
        %v724 = vrot.slane %v248, %v723
        %v725 = vlaneseq
        %v726 = vshrl.u32 %v725, 7
        %v727 = vsub.s32 5, %v726
        %v728 = vrot.slane %v248, %v727
        %v729 = vlaneseq
        %v730 = vshrl.u32 %v729, 7
        %v731 = vsub.s32 6, %v730
        %v732 = vrot.slane %v248, %v731
        %v733 = vlaneseq
        %v734 = vshrl.u32 %v733, 7
        %v735 = vsub.s32 7, %v734
        %v736 = vrot.slane %v248, %v735
        %v737 = vlaneseq
        %v738 = vshrl.u32 %v737, 7
        %v739 = vsub.s32 0, %v738
        %v740 = vrot.slane %v251, %v739
        %v741 = vlaneseq
        %v742 = vshrl.u32 %v741, 7
        %v743 = vsub.s32 1, %v742
        %v744 = vrot.slane %v251, %v743
        %v745 = vlaneseq
        %v746 = vshrl.u32 %v745, 7
        %v747 = vsub.s32 2, %v746
        %v748 = vrot.slane %v251, %v747
        %v749 = vlaneseq
        %v750 = vshrl.u32 %v749, 7
        %v751 = vsub.s32 3, %v750
        %v752 = vrot.slane %v251, %v751
        %v753 = vlaneseq
        %v754 = vshrl.u32 %v753, 7
        %v755 = vsub.s32 4, %v754
        %v756 = vrot.slane %v251, %v755
        %v757 = vlaneseq
        %v758 = vshrl.u32 %v757, 7
        %v759 = vsub.s32 5, %v758
        %v760 = vrot.slane %v251, %v759
        %v761 = vlaneseq
        %v762 = vshrl.u32 %v761, 7
        %v763 = vsub.s32 6, %v762
        %v764 = vrot.slane %v251, %v763
        %v765 = vlaneseq
        %v766 = vshrl.u32 %v765, 7
        %v767 = vsub.s32 7, %v766
        %v768 = vrot.slane %v251, %v767
        %v769 = vcombine.low %v644, %v648
        %v770 = vcombine.low %v652, %v656
        %v771 = vcombine.low %v660, %v664
        %v772 = vcombine.low %v668, %v672
        %v774 = vunpack.c.l.s4 1966171168
        %v775 = vunpack.c.0.s8 %v774
        %v776 = vlaneseq
        %v777 = vshrl.u32 %v776, 7
        %v778 = vsub.s32 %v775, %v777
        %v779 = vrot.slane %v769, %v778
        %v781 = vunpack.c.l.s4 1966171168
        %v782 = vunpack.c.0.s8 %v781
        %v783 = vlaneseq
        %v784 = vshrl.u32 %v783, 7
        %v785 = vsub.s32 %v782, %v784
        %v786 = vrot.slane %v770, %v785
        %v788 = vunpack.c.l.s4 1966171168
        %v789 = vunpack.c.0.s8 %v788
        %v790 = vlaneseq
        %v791 = vshrl.u32 %v790, 7
        %v792 = vsub.s32 %v789, %v791
        %v793 = vrot.slane %v771, %v792
        %v795 = vunpack.c.l.s4 1966171168
        %v796 = vunpack.c.0.s8 %v795
        %v797 = vlaneseq
        %v798 = vshrl.u32 %v797, 7
        %v799 = vsub.s32 %v796, %v798
        %v800 = vrot.slane %v772, %v799
        %v801 = vcombine.low %v779, %v786
        %v802 = vcombine.low %v793, %v800
        %v804 = vunpack.c.l.s4 1966171168
        %v805 = vunpack.c.0.s8 %v804
        %v806 = vlaneseq
        %v807 = vshrl.u32 %v806, 7
        %v808 = vsub.s32 %v805, %v807
        %v809 = vrot.slane %v801, %v808
        %v811 = vunpack.c.l.s4 1966171168
        %v812 = vunpack.c.0.s8 %v811
        %v813 = vlaneseq
        %v814 = vshrl.u32 %v813, 7
        %v815 = vsub.s32 %v812, %v814
        %v816 = vrot.slane %v802, %v815
        %v817 = vcombine.low %v809, %v816
        %v818 = vcombine.low %v676, %v680
        %v819 = vcombine.low %v684, %v688
        %v820 = vcombine.low %v692, %v696
        %v821 = vcombine.low %v700, %v704
        %v823 = vunpack.c.l.s4 1966171168
        %v824 = vunpack.c.0.s8 %v823
        %v825 = vlaneseq
        %v826 = vshrl.u32 %v825, 7
        %v827 = vsub.s32 %v824, %v826
        %v828 = vrot.slane %v818, %v827
        %v830 = vunpack.c.l.s4 1966171168
        %v831 = vunpack.c.0.s8 %v830
        %v832 = vlaneseq
        %v833 = vshrl.u32 %v832, 7
        %v834 = vsub.s32 %v831, %v833
        %v835 = vrot.slane %v819, %v834
        %v837 = vunpack.c.l.s4 1966171168
        %v838 = vunpack.c.0.s8 %v837
        %v839 = vlaneseq
        %v840 = vshrl.u32 %v839, 7
        %v841 = vsub.s32 %v838, %v840
        %v842 = vrot.slane %v820, %v841
        %v844 = vunpack.c.l.s4 1966171168
        %v845 = vunpack.c.0.s8 %v844
        %v846 = vlaneseq
        %v847 = vshrl.u32 %v846, 7
        %v848 = vsub.s32 %v845, %v847
        %v849 = vrot.slane %v821, %v848
        %v850 = vcombine.low %v828, %v835
        %v851 = vcombine.low %v842, %v849
        %v853 = vunpack.c.l.s4 1966171168
        %v854 = vunpack.c.0.s8 %v853
        %v855 = vlaneseq
        %v856 = vshrl.u32 %v855, 7
        %v857 = vsub.s32 %v854, %v856
        %v858 = vrot.slane %v850, %v857
        %v860 = vunpack.c.l.s4 1966171168
        %v861 = vunpack.c.0.s8 %v860
        %v862 = vlaneseq
        %v863 = vshrl.u32 %v862, 7
        %v864 = vsub.s32 %v861, %v863
        %v865 = vrot.slane %v851, %v864
        %v866 = vcombine.low %v858, %v865
        %v867 = vcombine.low %v708, %v712
        %v868 = vcombine.low %v716, %v720
        %v869 = vcombine.low %v724, %v728
        %v870 = vcombine.low %v732, %v736
        %v872 = vunpack.c.l.s4 1966171168
        %v873 = vunpack.c.0.s8 %v872
        %v874 = vlaneseq
        %v875 = vshrl.u32 %v874, 7
        %v876 = vsub.s32 %v873, %v875
        %v877 = vrot.slane %v867, %v876
        %v879 = vunpack.c.l.s4 1966171168
        %v880 = vunpack.c.0.s8 %v879
        %v881 = vlaneseq
        %v882 = vshrl.u32 %v881, 7
        %v883 = vsub.s32 %v880, %v882
        %v884 = vrot.slane %v868, %v883
        %v886 = vunpack.c.l.s4 1966171168
        %v887 = vunpack.c.0.s8 %v886
        %v888 = vlaneseq
        %v889 = vshrl.u32 %v888, 7
        %v890 = vsub.s32 %v887, %v889
        %v891 = vrot.slane %v869, %v890
        %v893 = vunpack.c.l.s4 1966171168
        %v894 = vunpack.c.0.s8 %v893
        %v895 = vlaneseq
        %v896 = vshrl.u32 %v895, 7
        %v897 = vsub.s32 %v894, %v896
        %v898 = vrot.slane %v870, %v897
        %v899 = vcombine.low %v877, %v884
        %v900 = vcombine.low %v891, %v898
        %v902 = vunpack.c.l.s4 1966171168
        %v903 = vunpack.c.0.s8 %v902
        %v904 = vlaneseq
        %v905 = vshrl.u32 %v904, 7
        %v906 = vsub.s32 %v903, %v905
        %v907 = vrot.slane %v899, %v906
        %v909 = vunpack.c.l.s4 1966171168
        %v910 = vunpack.c.0.s8 %v909
        %v911 = vlaneseq
        %v912 = vshrl.u32 %v911, 7
        %v913 = vsub.s32 %v910, %v912
        %v914 = vrot.slane %v900, %v913
        %v915 = vcombine.low %v907, %v914
        %v916 = vcombine.low %v740, %v744
        %v917 = vcombine.low %v748, %v752
        %v918 = vcombine.low %v756, %v760
        %v919 = vcombine.low %v764, %v768
        %v921 = vunpack.c.l.s4 1966171168
        %v922 = vunpack.c.0.s8 %v921
        %v923 = vlaneseq
        %v924 = vshrl.u32 %v923, 7
        %v925 = vsub.s32 %v922, %v924
        %v926 = vrot.slane %v916, %v925
        %v928 = vunpack.c.l.s4 1966171168
        %v929 = vunpack.c.0.s8 %v928
        %v930 = vlaneseq
        %v931 = vshrl.u32 %v930, 7
        %v932 = vsub.s32 %v929, %v931
        %v933 = vrot.slane %v917, %v932
        %v935 = vunpack.c.l.s4 1966171168
        %v936 = vunpack.c.0.s8 %v935
        %v937 = vlaneseq
        %v938 = vshrl.u32 %v937, 7
        %v939 = vsub.s32 %v936, %v938
        %v940 = vrot.slane %v918, %v939
        %v942 = vunpack.c.l.s4 1966171168
        %v943 = vunpack.c.0.s8 %v942
        %v944 = vlaneseq
        %v945 = vshrl.u32 %v944, 7
        %v946 = vsub.s32 %v943, %v945
        %v947 = vrot.slane %v919, %v946
        %v948 = vcombine.low %v926, %v933
        %v949 = vcombine.low %v940, %v947
        %v951 = vunpack.c.l.s4 1966171168
        %v952 = vunpack.c.0.s8 %v951
        %v953 = vlaneseq
        %v954 = vshrl.u32 %v953, 7
        %v955 = vsub.s32 %v952, %v954
        %v956 = vrot.slane %v948, %v955
        %v958 = vunpack.c.l.s4 1966171168
        %v959 = vunpack.c.0.s8 %v958
        %v960 = vlaneseq
        %v961 = vshrl.u32 %v960, 7
        %v962 = vsub.s32 %v959, %v961
        %v963 = vrot.slane %v949, %v962
        %v964 = vcombine.low %v956, %v963
        %965 = vset.pattern.permute.xlu0 0
        %966 = vperm.xlu0 %965, %v817
        %v967 = vpop.permute.xlu0 %966
        %968 = vset.pattern.permute.xlu0 0
        %969 = vperm.xlu0 %968, %v866
        %v970 = vpop.permute.xlu0 %969
        %971 = vset.pattern.permute.xlu0 0
        %972 = vperm.xlu0 %971, %v915
        %v973 = vpop.permute.xlu0 %972
        %974 = vset.pattern.permute.xlu0 0
        %975 = vperm.xlu0 %974, %v964
        %v976 = vpop.permute.xlu0 %975
        %v977 = vlaneseq
        %v978 = vshrl.u32 %v977, 7
        %v979 = vsub.s32 %v204, %v978
        %v980 = vrot.slane %v967, %v979
        %v981 = vlaneseq
        %v982 = vshrl.u32 %v981, 7
        %v983 = vsub.s32 %v597, %v982
        %v984 = vrot.slane %v970, %v983
        %v985 = vsel %vm602, %v984, %v980
        %v986 = vlaneseq
        %v987 = vshrl.u32 %v986, 7
        %v988 = vsub.s32 %v604, %v987
        %v989 = vrot.slane %v973, %v988
        %v990 = vsel %vm609, %v989, %v985
        %v991 = vlaneseq
        %v992 = vshrl.u32 %v991, 7
        %v993 = vsub.s32 %v611, %v992
        %v994 = vrot.slane %v976, %v993
        %v995 = vsel %vm616, %v994, %v990
        %v997 = vunpack.c.l.s4 1966171168
        %v998 = vunpack.c.0.s8 %v997
        %v999 = vlaneseq
        %v1000 = vshrl.u32 %v999, 7
        %v1001 = vsub.s32 %v998, %v1000
        %v1002 = vrot.slane %v995, %v1001
        %v1004 = vunpack.c.l.s4 1966171168
        %v1005 = vunpack.c.0.s8 %v1004
        %v1006 = vlaneseq
        %v1007 = vshrl.u32 %v1006, 7
        %v1008 = vsub.s32 %v1005, %v1007
        %v1009 = vrot.slane %v1002, %v1008
        %v1011 = vmax.f32 %v636, %v1009
        %1012 = vst.msk [vmem:[%s186] sm:$0x1] %vm634, %v1011
        // Predicated region
        $region33: #{tpu_custom_call.1} parent=23 // pred_check
          %p1013 = pneg %p188
        $region34: #{tpu_custom_call.1} parent=23 // pred_check_branch
          %1015 = sbr.rel (%p1013) target = $region36
        $region35: #{tpu_custom_call.1} parent=23 // pred_region
          %v1016 = vld [vmem:[%s180] sm:$0x1]
          %v1017 = vmul.f32 %v1016, 0.00390625
          %1018 = vst.msk [vmem:[%s180] sm:$0x1] %vm634, %v1017
        $region36: #{tpu_custom_call.1} parent=23 // pred_fallthru
          _
        %s1019 = sand.u32 %s71, 1
        %s1020 = scalar_lea.sflag [#allocation4], %s1019
        %s1021 = sand.u32 %s71, 1
        %s1022 = scalar_lea.vmem [#allocation5], %s1021
        %s1023 = sand.u32 %s97, 1
        %s1024 = scalar_lea.sflag [#allocation7], %s1023
        %s1025 = sand.u32 %s97, 1
        %s1026 = scalar_lea.vmem [#allocation6], %s1025
        // Predicated region
        $region37: #{tpu_custom_call.1} parent=23 // pred_check
          %p1027 = pneg %p81
        $region38: #{tpu_custom_call.1} parent=23 // pred_check_branch
          %1029 = sbr.rel (%p1027) target = $region40
        $region39: #{tpu_custom_call.1} parent=23 // pred_region
          %s1031 = ssub.s32 16, 16
          %1032 = vsyncadd %s1020, %s1031
          %s1033 = smul.addr %s27, 16
          %s1034 = scalar_lea.hbm %s1, %s1033
          %s1036 = sshll.u32 %s1022, 4
          %s1037 = int_to_ptr.vmem [resolvable:$true] %s1036
          %1039 = dma.vmem_to_hbm [thread:$0]  %s1037, 16, %s1034, %s1020
        $region40: #{tpu_custom_call.1} parent=23 // pred_fallthru
          _
        // Predicated region
        $region41: #{tpu_custom_call.1} parent=23 // pred_check
          %p1040 = pneg %p107
        $region42: #{tpu_custom_call.1} parent=23 // pred_check_branch
          %1042 = sbr.rel (%p1040) target = $region44
        $region43: #{tpu_custom_call.1} parent=23 // pred_region
          %s1044 = ssub.s32 16, 16
          %1045 = vsyncadd %s1024, %s1044
          %s1046 = smul.addr %s27, 16
          %s1047 = scalar_lea.hbm %s2, %s1046
          %s1049 = sshll.u32 %s1026, 4
          %s1050 = int_to_ptr.vmem [resolvable:$true] %s1049
          %1052 = dma.vmem_to_hbm [thread:$0]  %s1050, 16, %s1047, %s1024
        $region44: #{tpu_custom_call.1} parent=23 // pred_fallthru
          _
      $region24: #{tpu_custom_call.1} parent=5 // pred_fallthru
        _
      %p1053 = scmp.le.s32.totalorder 2, %s18
      // Predicated region
      $region45: #{tpu_custom_call.1} parent=5 // pred_check
        %p1054 = pneg %p1053
      $region46: #{tpu_custom_call.1} parent=5 // pred_check_branch
        %1056 = sbr.rel (%p1054) target = $region48
      $region47: #{tpu_custom_call.1} parent=5 // pred_region
        %s1057 = ssub.s32 %s18, 2
        // Predicated region
        $region49: #{tpu_custom_call.1} parent=47 // pred_check
          %p1058 = pneg %p87
        $region50: #{tpu_custom_call.1} parent=47 // pred_check_branch
          %1060 = sbr.rel (%p1058) target = $region52
        $region51: #{tpu_custom_call.1} parent=47 // pred_region
          %s1061 = sand.u32 %s72, 1
          %s1062 = scalar_lea.sflag [#allocation4], %s1061
          %s1063 = sand.u32 %s72, 1
          %s1064 = scalar_lea.vmem [#allocation5], %s1063
          %1065 = dma.done %s1062, 16
        $region52: #{tpu_custom_call.1} parent=47 // pred_fallthru
          _
        // Predicated region
        $region53: #{tpu_custom_call.1} parent=47 // pred_check
          %p1066 = pneg %p113
        $region54: #{tpu_custom_call.1} parent=47 // pred_check_branch
          %1068 = sbr.rel (%p1066) target = $region56
        $region55: #{tpu_custom_call.1} parent=47 // pred_region
          %s1069 = sand.u32 %s98, 1
          %s1070 = scalar_lea.sflag [#allocation7], %s1069
          %s1071 = sand.u32 %s98, 1
          %s1072 = scalar_lea.vmem [#allocation6], %s1071
          %1073 = dma.done %s1070, 16
        $region56: #{tpu_custom_call.1} parent=47 // pred_fallthru
          _
      $region48: #{tpu_custom_call.1} parent=5 // pred_fallthru
        _
    $region6: #{tpu_custom_call.1} parent=1 // loop_footer
      %s22 = sadd.s32 1, %s18
    $region7: #{tpu_custom_call.1} parent=1 // loop_footer_branch
      %17 = sbr.rel target = $region3
    $region8: #{tpu_custom_call.1} parent=1 // loop_exit
      _
    %1074 = vsyncpa [#allocation3], 1
    %s1075 = scalar_lea.sflag [#allocation3], 1
    %1076 = vsyncpa %s1075, 1
    %1077 = vsyncpa [#allocation4], 1
    %s1078 = scalar_lea.sflag [#allocation4], 1
    %1079 = vsyncpa %s1078, 1
    %1080 = vsyncpa [#allocation7], 1
    %s1081 = scalar_lea.sflag [#allocation7], 1
    %1082 = vsyncpa %s1081, 1

</llo_original>
